<compile_context>
chip_gen: v7x
topology: tpu7x:2x2x1
jax: 0.10.0
libtpu: 0.0.40
codegen_flags: <defaults>
</compile_context>

<pallas_src>
import jax
import jax.numpy as jnp
from jax.experimental import pallas as pl
from jax.experimental.pallas import tpu as pltpu


def _ceil_to(x, m):
    return -(-x // m) * m


def _padded_tile_bytes(shape, dtype):
    """VMEM footprint of a tile, accounting for lane (128) / sublane padding."""
    d = jnp.dtype(dtype)
    s = [int(v) for v in shape]
    if len(s) >= 1:
        s[-1] = _ceil_to(s[-1], 128)
    if len(s) >= 2:
        sub = 8 * max(1, 4 // max(1, d.itemsize))   # 8 for f32, 16 for bf16, 32 for i8
        s[-2] = _ceil_to(s[-2], sub)
    n = 1
    for v in s:
        n *= v
    return n * d.itemsize


def _fused_conv_unshuffle_kernel(xm_ref, xh_ref, w_ref, o_ref):
    """One (TH/2, W/2) output tile of the fused conv3x3(stride1)+PixelUnshuffle(2).

    xm_ref: (THo, 2, Q, 2*Cin)  row-pairs [i*THo, (i+1)*THo) of the padded NHWC image
    xh_ref: (1,   2, Q, 2*Cin)  halo row-pair (i+1)*THo
    w_ref : (16*Cin, 4*Cout)    fused weight; rows ordered (u, v, cin), cols c*4+i*2+j
    o_ref : (THo, Wo, 4*Cout)
    """
    THo, _, Q, C2 = xm_ref.shape
    _, Wo, Co4 = o_ref.shape

    # Haloed row-pair block (THo + 1 row-pairs) — small VMEM-local concat.
    x_all = jnp.concatenate([xm_ref[...], xh_ref[...]], axis=0)     # (THo+1, 2, Q, 2Cin)

    # im2col with only static, contiguous slices (row/col parity was folded in the
    # wrapper via a free reshape, so there are no strided or per-row slices here).
    views = []
    for u in range(4):                                  # window row offset u = i + dy
        rows = x_all[u // 2:u // 2 + THo, u % 2]        # (THo, Q, 2Cin)
        for j in range(2):                              # column-pair offset (v = 2j + p)
            views.append(rows[:, j:j + Wo, :])          # (THo, Wo, 2Cin)
    lhs = jnp.concatenate(views, axis=-1).reshape(THo * Wo, 8 * C2)  # (M, 16*Cin)

    # Single MXU matmul per tile, fp32 accumulation; one batched store.
    acc = jnp.dot(lhs, w_ref[...], preferred_element_type=jnp.float32)
    o_ref[...] = acc.reshape(THo, Wo, Co4).astype(o_ref.dtype)


def downsample_pallas(x, weight, *, tile_h=None, compute_dtype=None, interpret=False):
    """x: (B, C, H, W); weight: (C//2, C, 3, 3) PyTorch Conv2d (OIHW) layout.

    Returns (B, 2*C, H//2, W//2), matching Downsample.forward.
    """
    B, C, H, W = map(int, x.shape)
    Cout = C // 2
    Co4 = 4 * Cout                                   # = 2 * n_feat
    assert weight.shape == (Cout, C, 3, 3), weight.shape
    assert H % 2 == 0 and W % 2 == 0, "PixelUnshuffle(2) requires even H and W"

    out_dtype = x.dtype
    cdt = jnp.dtype(compute_dtype) if compute_dtype is not None else jnp.dtype(x.dtype)

    Wo = W // 2
    Q = W // 2 + 1                                   # padded-width column pairs

    # ---- lane/sublane-padding-aware VMEM footprint model --------------------------
    def footprint(th):
        tho = th // 2
        in_m = _padded_tile_bytes((tho, 2, Q, 2 * C), cdt)
        in_h = _padded_tile_bytes((1, 2, Q, 2 * C), cdt)
        w_b = _padded_tile_bytes((16 * C, Co4), cdt)
        o_b = _padded_tile_bytes((tho, Wo, Co4), out_dtype)
        tmp = (_padded_tile_bytes((tho + 1, 2, Q, 2 * C), cdt)       # in-kernel concat
               + _padded_tile_bytes((tho * Wo, 16 * C), cdt)         # im2col LHS
               + _padded_tile_bytes((tho * Wo, Co4), jnp.float32))   # fp32 accumulator
        return 2 * (in_m + in_h + o_b) + 2 * w_b + tmp               # 2x = double-buffer

    try:
        vmem_cap = int(pltpu.get_tpu_info().vmem_capacity_bytes)
    except Exception:
        vmem_cap = 128 << 20                          # v5e/v6e default; v7x is 64 MiB
    budget = max(16 << 20, min(vmem_cap // 2 - (8 << 20), 56 << 20))

    if tile_h is None:
        # prefer >= 2 row blocks when B == 1 so both v7x TensorCores get work
        max_th = H if B >= 2 else max(2, (H // 2) // 2 * 2)
        TH = 2
        for th in (512, 384, 256, 192, 128, 96, 64, 48, 32, 24, 16, 12, 8, 6, 4, 2):
            if th <= max_th and footprint(th) <= budget:
                TH = th
                break
    else:
        TH = max(2, (min(int(tile_h), H) // 2) * 2)

    THo = TH // 2
    NB = pl.cdiv(H, TH)
    Hp = NB * TH

    # ---- wrapper preprocessing: one transpose+cast+pad pass, then a FREE reshape ----
    x_nhwc = jnp.transpose(x, (0, 2, 3, 1)).astype(cdt)                 # (B, H, W, C)
    xp = jnp.pad(x_nhwc, ((0, 0), (1, 1 + Hp - H), (1, 1), (0, 0)))     # (B, Hp+2, W+2, C)
    xq = xp.reshape(B, Hp // 2 + 1, 2, Q, 2 * C)                        # parity folded

    # ---- fused weight: 3x3 kernel embedded at the 4 parity offsets of a 4x4 window --
    w_t = jnp.transpose(weight, (2, 3, 1, 0)).astype(jnp.float32)       # (3,3,Cin,Cout)
    w4 = jnp.zeros((4, 4, C, Cout, 2, 2), jnp.float32)
    for i in (0, 1):
        for j in (0, 1):
            w4 = w4.at[i:i + 3, j:j + 3, :, :, i, j].set(w_t)
    w2 = w4.reshape(16 * C, Co4).astype(cdt)   # rows (u, v, cin); cols c*4 + i*2 + j

    need = footprint(TH)
    vmem_limit = int(min(max(need + (8 << 20), 32 << 20),
                         max(vmem_cap - (8 << 20), 32 << 20)))

    flops = 2 * B * (Hp // 2) * Wo * (16 * C) * Co4
    bytes_accessed = int(xq.size * cdt.itemsize
                         + B * NB * 2 * Q * 2 * C * cdt.itemsize        # halo re-reads
                         + w2.size * cdt.itemsize
                         + B * (Hp // 2) * Wo * Co4 * jnp.dtype(out_dtype).itemsize)

    y = pl.pallas_call(
        _fused_conv_unshuffle_kernel,
        out_shape=jax.ShapeDtypeStruct((B, Hp // 2, Wo, Co4), out_dtype),
        grid_spec=pltpu.PrefetchScalarGridSpec(
            num_scalar_prefetch=0,
            grid=(B, NB),
            in_specs=[
                # main block: THo row-pairs, plain Blocked indexing
                pl.BlockSpec((None, THo, 2, Q, 2 * C),
                             lambda b, i: (b, i, 0, 0, 0)),
                # halo block: single row-pair at (i+1)*THo (same HBM array, no copy)
                pl.BlockSpec((None, 1, 2, Q, 2 * C),
                             lambda b, i: (b, (i + 1) * THo, 0, 0, 0)),
                # fused weight, resident across all grid steps
                pl.BlockSpec((16 * C, Co4), lambda b, i: (0, 0)),
            ],
            out_specs=pl.BlockSpec((None, THo, Wo, Co4),
                                   lambda b, i: (b, i, 0, 0)),
        ),
        compiler_params=pltpu.CompilerParams(
            dimension_semantics=("parallel", "parallel"),
            vmem_limit_bytes=vmem_limit),
        cost_estimate=pl.CostEstimate(flops=flops, transcendentals=0,
                                      bytes_accessed=bytes_accessed),
        interpret=interpret,
    )(xq, xq, w2)                                           # (B, Hp//2, Wo, 2*C)

    # Drop padded rows; NHWC -> NCHW (module contract; one XLA pass over the output).
    # TODO(synk): with n_feat < 64 the kernel's 4*Cout lane dim is < 128 (masked stores);
    # kept as-is to avoid an in-kernel cross-lane relayout of the accumulator.
    return jnp.transpose(y[:, :H // 2], (0, 3, 1, 2))


def _ref_downsample(x, weight):
    """Pure-JAX reference mirroring the PyTorch module."""
    y = jax.lax.conv_general_dilated(
        x, weight, window_strides=(1, 1), padding=((1, 1), (1, 1)),
        dimension_numbers=("NCHW", "OIHW", "NCHW"),
        precision=jax.lax.Precision.HIGHEST)
    B, Co, H, W = y.shape
    z = y.reshape(B, Co, H // 2, 2, W // 2, 2)
    return jnp.transpose(z, (0, 1, 3, 5, 2, 4)).reshape(B, 4 * Co, H // 2, W // 2)


if __name__ == "__main__":
    key = jax.random.PRNGKey(0)
    kx, kw = jax.random.split(key)

    B, n_feat, H, W = 2, 8, 16, 16
    x = jax.random.normal(kx, (B, n_feat, H, W), dtype=jnp.float32)
    weight = (jax.random.normal(kw, (n_feat // 2, n_feat, 3, 3), jnp.float32)
              / jnp.sqrt(9.0 * n_feat))

    y_ref = _ref_downsample(x, weight)

    # float32 operands
    y = jax.block_until_ready(downsample_pallas(x, weight))
    assert y.shape == (B, 2 * n_feat, H // 2, W // 2), y.shape
    err = float(jnp.max(jnp.abs(y - y_ref)))
    assert err < 5e-2, f"fp32 max abs err {err}"

    # bf16 operand streaming / fp32 accumulation (perf path), looser tolerance
    y_bf16 = jax.block_until_ready(
        downsample_pallas(x, weight, compute_dtype=jnp.bfloat16))
    err_bf = float(jnp.max(jnp.abs(y_bf16 - y_ref)))
    assert err_bf < 2e-1, f"bf16 max abs err {err_bf}"

    print("KERNEL_OK")
</pallas_src>

<mosaic_0001>
module attributes {stable_mosaic.version = 11 : i64} {
  func.func @_fused_conv_unshuffle_kernel(%arg0: i32, %arg1: i32, %arg2: memref<1x8x2x9x16xf32, #tpu.memory_space<vmem>>, %arg3: memref<1x1x2x9x16xf32, #tpu.memory_space<vmem>>, %arg4: memref<128x16xf32, #tpu.memory_space<vmem>>, %arg5: memref<1x8x8x16xf32, #tpu.memory_space<vmem>>) attributes {dimension_semantics = [#tpu.dimension_semantics<parallel>, #tpu.dimension_semantics<parallel>], iteration_bounds = array<i64: 2, 1>, scalar_prefetch = 0 : i64, scratch_operands = 0 : i64, tpu.core_type = #tpu.core_type<tc>, window_params = [{transform_indices = @transform_0, window_bounds = array<i64: 1, 8, 2, 9, 16>}, {transform_indices = @transform_1, window_bounds = array<i64: 1, 1, 2, 9, 16>}, {pipeline_mode = #tpu.pipeline_mode<synchronous>, transform_indices = @transform_2, window_bounds = array<i64: 128, 16>}, {transform_indices = @transform_3, window_bounds = array<i64: 1, 8, 8, 16>}]} {
    %c0 = arith.constant 0 : index
    %c0_0 = arith.constant 0 : index
    %c0_1 = arith.constant 0 : index
    %c0_2 = arith.constant 0 : index
    %c0_3 = arith.constant 0 : index
    %0 = vector.load %arg2[%c0, %c0_0, %c0_1, %c0_2, %c0_3] : memref<1x8x2x9x16xf32, #tpu.memory_space<vmem>>, vector<1x8x2x9x16xf32>
    %1 = vector.shape_cast %0 : vector<1x8x2x9x16xf32> to vector<8x2x9x16xf32>
    %c0_4 = arith.constant 0 : index
    %c0_5 = arith.constant 0 : index
    %c0_6 = arith.constant 0 : index
    %c0_7 = arith.constant 0 : index
    %c0_8 = arith.constant 0 : index
    %2 = vector.load %arg3[%c0_4, %c0_5, %c0_6, %c0_7, %c0_8] : memref<1x1x2x9x16xf32, #tpu.memory_space<vmem>>, vector<1x1x2x9x16xf32>
    %3 = vector.shape_cast %2 : vector<1x1x2x9x16xf32> to vector<1x2x9x16xf32>
    %4 = tpu.concatenate %1, %3 in 0 : vector<8x2x9x16xf32>, vector<1x2x9x16xf32> -> vector<9x2x9x16xf32>
    %5 = vector.extract_strided_slice %4 {offsets = [0, 0, 0, 0], sizes = [8, 1, 9, 16], strides = [1, 1, 1, 1]} : vector<9x2x9x16xf32> to vector<8x1x9x16xf32>
    %6 = vector.shape_cast %5 : vector<8x1x9x16xf32> to vector<8x9x16xf32>
    %7 = vector.extract_strided_slice %6 {offsets = [0, 0, 0], sizes = [8, 8, 16], strides = [1, 1, 1]} : vector<8x9x16xf32> to vector<8x8x16xf32>
    %8 = vector.extract_strided_slice %6 {offsets = [0, 1, 0], sizes = [8, 8, 16], strides = [1, 1, 1]} : vector<8x9x16xf32> to vector<8x8x16xf32>
    %9 = vector.extract_strided_slice %4 {offsets = [0, 1, 0, 0], sizes = [8, 1, 9, 16], strides = [1, 1, 1, 1]} : vector<9x2x9x16xf32> to vector<8x1x9x16xf32>
    %10 = vector.shape_cast %9 : vector<8x1x9x16xf32> to vector<8x9x16xf32>
    %11 = vector.extract_strided_slice %10 {offsets = [0, 0, 0], sizes = [8, 8, 16], strides = [1, 1, 1]} : vector<8x9x16xf32> to vector<8x8x16xf32>
    %12 = vector.extract_strided_slice %10 {offsets = [0, 1, 0], sizes = [8, 8, 16], strides = [1, 1, 1]} : vector<8x9x16xf32> to vector<8x8x16xf32>
    %13 = vector.extract_strided_slice %4 {offsets = [1, 0, 0, 0], sizes = [8, 1, 9, 16], strides = [1, 1, 1, 1]} : vector<9x2x9x16xf32> to vector<8x1x9x16xf32>
    %14 = vector.shape_cast %13 : vector<8x1x9x16xf32> to vector<8x9x16xf32>
    %15 = vector.extract_strided_slice %14 {offsets = [0, 0, 0], sizes = [8, 8, 16], strides = [1, 1, 1]} : vector<8x9x16xf32> to vector<8x8x16xf32>
    %16 = vector.extract_strided_slice %14 {offsets = [0, 1, 0], sizes = [8, 8, 16], strides = [1, 1, 1]} : vector<8x9x16xf32> to vector<8x8x16xf32>
    %17 = vector.extract_strided_slice %4 {offsets = [1, 1, 0, 0], sizes = [8, 1, 9, 16], strides = [1, 1, 1, 1]} : vector<9x2x9x16xf32> to vector<8x1x9x16xf32>
    %18 = vector.shape_cast %17 : vector<8x1x9x16xf32> to vector<8x9x16xf32>
    %19 = vector.extract_strided_slice %18 {offsets = [0, 0, 0], sizes = [8, 8, 16], strides = [1, 1, 1]} : vector<8x9x16xf32> to vector<8x8x16xf32>
    %20 = vector.extract_strided_slice %18 {offsets = [0, 1, 0], sizes = [8, 8, 16], strides = [1, 1, 1]} : vector<8x9x16xf32> to vector<8x8x16xf32>
    %21 = tpu.concatenate %7, %8, %11, %12, %15, %16, %19, %20 in 2 : vector<8x8x16xf32>, vector<8x8x16xf32>, vector<8x8x16xf32>, vector<8x8x16xf32>, vector<8x8x16xf32>, vector<8x8x16xf32>, vector<8x8x16xf32>, vector<8x8x16xf32> -> vector<8x8x128xf32>
    %22 = vector.shape_cast %21 : vector<8x8x128xf32> to vector<64x128xf32>
    %c0_9 = arith.constant 0 : index
    %c0_10 = arith.constant 0 : index
    %23 = vector.load %arg4[%c0_9, %c0_10] : memref<128x16xf32, #tpu.memory_space<vmem>>, vector<128x16xf32>
    %cst = arith.constant dense<0.000000e+00> : vector<64x16xf32>
    %24 = tpu.matmul %22, %23, %cst {dimension_numbers = #tpu.dot_dimension_numbers<[1], [0], [0], [1], [0, 0, 1, 1], [], []>} : vector<64x128xf32>, vector<128x16xf32>, vector<64x16xf32> -> vector<64x16xf32>
    %25 = vector.shape_cast %24 : vector<64x16xf32> to vector<8x8x16xf32>
    %c0_11 = arith.constant 0 : index
    %c0_12 = arith.constant 0 : index
    %c0_13 = arith.constant 0 : index
    %c0_14 = arith.constant 0 : index
    %26 = vector.load %arg5[%c0_11, %c0_12, %c0_13, %c0_14] : memref<1x8x8x16xf32, #tpu.memory_space<vmem>>, vector<1x8x8x16xf32>
    %27 = vector.shape_cast %26 : vector<1x8x8x16xf32> to vector<8x8x16xf32>
    %28 = vector.shape_cast %25 : vector<8x8x16xf32> to vector<1x8x8x16xf32>
    tpu.vector_store %arg5[%c0_11, %c0_12, %c0_13, %c0_14], %28 {strides = array<i32>} : memref<1x8x8x16xf32, #tpu.memory_space<vmem>>, vector<1x8x8x16xf32>,
    return
  }
  func.func @transform_0(%arg0: i32, %arg1: i32) -> (i32, i32, i32, i32, i32) {
    %c0_i32 = arith.constant 0 : i32
    %c0_i32_0 = arith.constant 0 : i32
    %c0_i32_1 = arith.constant 0 : i32
    %c0_i32_2 = arith.constant 0 : i32
    return %arg0, %arg1, %c0_i32, %c0_i32_0, %c0_i32_1 : i32, i32, i32, i32, i32
  }
  func.func @transform_1(%arg0: i32, %arg1: i32) -> (i32, i32, i32, i32, i32) {
    %c1_i32 = arith.constant 1 : i32
    %0 = arith.addi %arg1, %c1_i32 : i32
    %c8_i32 = arith.constant 8 : i32
    %1 = arith.muli %0, %c8_i32 : i32
    %c0_i32 = arith.constant 0 : i32
    %c0_i32_0 = arith.constant 0 : i32
    %c0_i32_1 = arith.constant 0 : i32
    %c0_i32_2 = arith.constant 0 : i32
    return %arg0, %1, %c0_i32, %c0_i32_0, %c0_i32_1 : i32, i32, i32, i32, i32
  }
  func.func @transform_2(%arg0: i32, %arg1: i32) -> (i32, i32) {
    %c0_i32 = arith.constant 0 : i32
    %c0_i32_0 = arith.constant 0 : i32
    %c0_i32_1 = arith.constant 0 : i32
    return %c0_i32, %c0_i32_0 : i32, i32
  }
  func.func @transform_3(%arg0: i32, %arg1: i32) -> (i32, i32, i32, i32) {
    %c0_i32 = arith.constant 0 : i32
    %c0_i32_0 = arith.constant 0 : i32
    %c0_i32_1 = arith.constant 0 : i32
    return %arg0, %arg1, %c0_i32, %c0_i32_0 : i32, i32, i32, i32
  }
}

</mosaic_0001>

<llo_original>
// kernel: tpu_custom_call.1
$region0: #{tpu_custom_call.1}
  #allocation0 [shape = 'u32[]', space=smem, size = 0x4, offset = 0x4, fixed_abs, tag = 'smem constant byte address 0x4 - core index']
  #allocation1 [shape = 'u32[144,128]{1,0:T(1,128)}', space=vmem, size = 0x12000, scoped, tag = 'internal scratch']
  %s0 = inlined_call_operand.vmem [shape: f32[2,9,2,9,16], index: 0, kind: input, shape index: {}]
  %s1 = inlined_call_operand.vmem [shape: f32[2,9,2,9,16], index: 1, kind: input, shape index: {}]
  %s2 = inlined_call_operand.vmem [shape: f32[128,16], index: 2, kind: input, shape index: {}]
  %s3 = inlined_call_operand.hbm [shape: f32[2,8,8,16], index: 3, kind: output, shape index: {}]
  %s4 = sld [smem:[#allocation0]]
  $region45: #{tpu_custom_call.1} parent=0
    _
  %s6 = ssub.s32 1, %s4
  %s7 = scalar_select 0, %s6, %s4
  $region1: #{tpu_custom_call.1} parent=0
    #allocation2 [shape = 'u8[65536]{0}', space=vmem, size = 0x10000, scoped, tag = 'output window, operand 0']
    #allocation3 [shape = 's32[2]{0}', space=sflag, size = 0x8, scoped, tag = 'scoped memory for tpu_custom_call.1']
    %8 = vsyncpa [#allocation3], 0
    %s9 = scalar_lea.sflag [#allocation3], 1
    %10 = vsyncpa %s9, 0
    loop: start=0, step=1, limit=4
    $region2: #{tpu_custom_call.1} parent=1 // loop_pre_header
      _
    $region3: #{tpu_custom_call.1} parent=1 // loop_header
      %s12 = sphi 0, %s16
      %p13 = scmp.ge.s32.totalorder %s12, 4
      %s19 = sphi 0, %s31
      %s20 = sphi 0, %s27
      %s21 = sphi 0, %s19
      %s22 = sphi 0, %s20
      %s23 = sphi 0, %s21
      %s24 = sphi 0, %s22
      %s36 = sphi 0, %s38
      %s39 = sphi 0, %s36
      %s40 = sphi 0, %s39
      %s56 = sphi 0, %s40
      %s68 = sphi 0, %s70
      %s71 = sphi 0, %s68
      %s72 = sphi 0, %s71
      %s88 = sphi 0, %s72
      %s92 = sphi 0, %s92
      %s94 = sphi 0, %s92
      %s95 = sphi 0, %s94
      %s109 = sphi 0, %s95
      %s117 = sphi 0, %s119
      %s120 = sphi 0, %s117
      %s121 = sphi 0, %s120
      %s137 = sphi 0, %s121
    $region4: #{tpu_custom_call.1} parent=1 // loop_header_branch
      %15 = sbr.rel (%p13) target = $region8
    $region5: #{tpu_custom_call.1} parent=1 // loop_body
      %s17 = ssub.s32 %s12, 1
      %s18 = ssub.s32 %s12, 2
      %s25 = sadd.s32 1, %s20
      %p26 = scmp.ge.s32.totalorder %s25, 1
      %s27 = scalar_select %p26, 0, %s25
      %s28 = sadd.s32 1, %s19
      %s29 = scalar_select %p26, %s28, %s19
      %p30 = scmp.ge.s32.totalorder %s29, 2
      %s31 = scalar_select %p30, 0, %s29
      %s32 = ssub.s32 %s19, %s31
      %s33 = ssub.s32 %s20, %s27
      %s34 = sor.u32 %s32, %s33
      %p35 = scmp.eq.s32.totalorder %s34, 0
      %s37 = sadd.s32 %s36, 1
      %s38 = scalar_select %p35, %s36, %s37
      %p41 = pneg %p35
      %p42 = scmp.eq.s32.totalorder %s12, 1
      %p43 = por %p41, %p42
      %p44 = scmp.ne.s32.totalorder %s36, %s39
      %p45 = scmp.eq.s32.totalorder %s12, 0
      %p46 = por %p44, %p45
      %p47 = scmp.ne.s32.totalorder %s36, %s39
      %p48 = scmp.eq.s32.totalorder %s17, 1
      %p49 = por %p47, %p48
      %p50 = scmp.ne.s32.totalorder %s39, %s40
      %p51 = scmp.eq.s32.totalorder %s17, 0
      %p52 = por %p50, %p51
      %p53 = scmp.ne.s32.totalorder %s39, %s40
      %p54 = scmp.eq.s32.totalorder %s18, 1
      %p55 = por %p53, %p54
      %p57 = scmp.ne.s32.totalorder %s40, %s56
      %p58 = scmp.eq.s32.totalorder %s18, 0
      %p59 = por %p57, %p58
      %s60 = sadd.s32 %s20, 1
      %s61 = smul.u32 %s60, 8
      %s62 = sadd.s32 %s27, 1
      %s63 = smul.u32 %s62, 8
      %s64 = ssub.s32 %s19, %s31
      %s65 = ssub.s32 %s61, %s63
      %s66 = sor.u32 %s64, %s65
      %p67 = scmp.eq.s32.totalorder %s66, 0
      %s69 = sadd.s32 %s68, 1
      %s70 = scalar_select %p67, %s68, %s69
      %p73 = pneg %p67
      %p74 = scmp.eq.s32.totalorder %s12, 1
      %p75 = por %p73, %p74
      %p76 = scmp.ne.s32.totalorder %s68, %s71
      %p77 = scmp.eq.s32.totalorder %s12, 0
      %p78 = por %p76, %p77
      %p79 = scmp.ne.s32.totalorder %s68, %s71
      %p80 = scmp.eq.s32.totalorder %s17, 1
      %p81 = por %p79, %p80
      %p82 = scmp.ne.s32.totalorder %s71, %s72
      %p83 = scmp.eq.s32.totalorder %s17, 0
      %p84 = por %p82, %p83
      %p85 = scmp.ne.s32.totalorder %s71, %s72
      %p86 = scmp.eq.s32.totalorder %s18, 1
      %p87 = por %p85, %p86
      %p89 = scmp.ne.s32.totalorder %s72, %s88
      %p90 = scmp.eq.s32.totalorder %s18, 0
      %p91 = por %p89, %p90
      %s93 = sadd.s32 %s92, 1
      %p96 = scmp.eq.s32.totalorder %s12, 1
      %p97 = scmp.ne.s32.totalorder %s92, %s94
      %p98 = scmp.eq.s32.totalorder %s12, 0
      %p99 = por %p97, %p98
      %p100 = scmp.ne.s32.totalorder %s92, %s94
      %p101 = scmp.eq.s32.totalorder %s17, 1
      %p102 = por %p100, %p101
      %p103 = scmp.ne.s32.totalorder %s94, %s95
      %p104 = scmp.eq.s32.totalorder %s17, 0
      %p105 = por %p103, %p104
      %p106 = scmp.ne.s32.totalorder %s94, %s95
      %p107 = scmp.eq.s32.totalorder %s18, 1
      %p108 = por %p106, %p107
      %p110 = scmp.ne.s32.totalorder %s95, %s109
      %p111 = scmp.eq.s32.totalorder %s18, 0
      %p112 = por %p110, %p111
      %s113 = ssub.s32 %s19, %s31
      %s114 = ssub.s32 %s20, %s27
      %s115 = sor.u32 %s113, %s114
      %p116 = scmp.eq.s32.totalorder %s115, 0
      %s118 = sadd.s32 %s117, 1
      %s119 = scalar_select %p116, %s117, %s118
      %p122 = pneg %p116
      %p123 = scmp.eq.s32.totalorder %s12, 1
      %p124 = por %p122, %p123
      %p125 = scmp.ne.s32.totalorder %s117, %s120
      %p126 = scmp.eq.s32.totalorder %s12, 0
      %p127 = por %p125, %p126
      %p128 = scmp.ne.s32.totalorder %s117, %s120
      %p129 = scmp.eq.s32.totalorder %s17, 1
      %p130 = por %p128, %p129
      %p131 = scmp.ne.s32.totalorder %s120, %s121
      %p132 = scmp.eq.s32.totalorder %s17, 0
      %p133 = por %p131, %p132
      %p134 = scmp.ne.s32.totalorder %s120, %s121
      %p135 = scmp.eq.s32.totalorder %s18, 1
      %p136 = por %p134, %p135
      %p138 = scmp.ne.s32.totalorder %s121, %s137
      %p139 = scmp.eq.s32.totalorder %s18, 0
      %p140 = por %p138, %p139
      %p141 = scmp.le.s32.totalorder 1, %s12
      %p142 = scmp.lt.s32.totalorder %s12, 3
      %p143 = pnand %p141, %p142
      %p144 = pneg %p143
      // Predicated region
      $region9: #{tpu_custom_call.1} parent=5 // pred_check
        _
      $region10: #{tpu_custom_call.1} parent=5 // pred_check_branch
        %146 = sbr.rel (%p143) target = $region12
      $region11: #{tpu_custom_call.1} parent=5 // pred_region
        %s147 = ssub.s32 %s12, 1
        // Predicated region
        $region13: #{tpu_custom_call.1} parent=11 // pred_check
          %p148 = pneg %p105
        $region14: #{tpu_custom_call.1} parent=11 // pred_check_branch
          %150 = sbr.rel (%p148) target = $region16
        $region15: #{tpu_custom_call.1} parent=11 // pred_region
          _
        $region16: #{tpu_custom_call.1} parent=11 // pred_fallthru
          _
      $region12: #{tpu_custom_call.1} parent=5 // pred_fallthru
        _
      %p151 = scmp.lt.s32.totalorder %s12, 2
      // Predicated region
      $region17: #{tpu_custom_call.1} parent=5 // pred_check
        %p152 = pneg %p151
      $region18: #{tpu_custom_call.1} parent=5 // pred_check_branch
        %154 = sbr.rel (%p152) target = $region20
      $region19: #{tpu_custom_call.1} parent=5 // pred_region
        // Predicated region
        $region21: #{tpu_custom_call.1} parent=19 // pred_check
          %p155 = pneg %p46
        $region22: #{tpu_custom_call.1} parent=19 // pred_check_branch
          %157 = sbr.rel (%p155) target = $region24
        $region23: #{tpu_custom_call.1} parent=19 // pred_region
          %s158 = smul.u32 8, %s20
          %s159 = ssub.s32 9, %s158
          %p160 = scmp.lt.s32.totalorder %s159, 8
          %s161 = scalar_select %p160, %s159, 8
          %s162 = smul.u32 128, %s161
          %s163 = smul.u32 %s162, 2
          %s164 = smul.u32 %s163, 2
          %p165 = scmp.lt.s32.totalorder %s19, 1
          %s166 = scalar_select %p165, %s19, 1
          %p167 = scmp.lt.s32.totalorder %s158, 8
          %s168 = scalar_select %p167, %s158, 8
          %s169 = smul.addr %s168, 4
          %s170 = smul.addr %s166, 36
          %s171 = sadd.s32 %s169, %s170
          %s172 = smul.addr %s171, 8
          %s173 = scalar_lea.vmem %s0, %s172
          %s174 = smul.u32 8, %s20
          %s175 = ssub.s32 9, %s174
          %p176 = scmp.lt.s32.totalorder %s175, 8
          %s177 = scalar_select %p176, %s175, 8
          %s178 = smul.u32 128, %s177
          %s179 = smul.u32 %s178, 2
          %s180 = smul.u32 %s179, 2
        $region24: #{tpu_custom_call.1} parent=19 // pred_fallthru
          _
        // Predicated region
        $region25: #{tpu_custom_call.1} parent=19 // pred_check
          %p181 = pneg %p78
        $region26: #{tpu_custom_call.1} parent=19 // pred_check_branch
          %183 = sbr.rel (%p181) target = $region28
        $region27: #{tpu_custom_call.1} parent=19 // pred_region
          %s184 = sadd.s32 %s20, 1
          %s185 = smul.u32 %s184, 8
          %p186 = scmp.lt.s32.totalorder %s19, 1
          %s187 = scalar_select %p186, %s19, 1
          %p188 = scmp.lt.s32.totalorder %s185, 8
          %s189 = scalar_select %p188, %s185, 8
          %s190 = smul.addr %s189, 4
          %s191 = smul.addr %s187, 36
          %s192 = sadd.s32 %s190, %s191
          %s193 = smul.addr %s192, 8
          %s194 = scalar_lea.vmem %s1, %s193
          %s195 = sadd.s32 %s20, 1
          %s196 = smul.u32 %s195, 8
        $region28: #{tpu_custom_call.1} parent=19 // pred_fallthru
          _
      $region20: #{tpu_custom_call.1} parent=5 // pred_fallthru
        _
      %p197 = scmp.le.s32.totalorder 1, %s12
      %p198 = scmp.lt.s32.totalorder %s12, 3
      %p199 = pnand %p197, %p198
      %p200 = pneg %p199
      // Predicated region
      $region29: #{tpu_custom_call.1} parent=5 // pred_check
        _
      $region30: #{tpu_custom_call.1} parent=5 // pred_check_branch
        %202 = sbr.rel (%p199) target = $region32
      $region31: #{tpu_custom_call.1} parent=5 // pred_region
        %s203 = ssub.s32 %s12, 1
        %s204 = smul.u32 8, %s22
        %s205 = ssub.s32 9, %s204
        %p206 = scmp.lt.s32.totalorder %s205, 8
        %s207 = scalar_select %p206, %s205, 8
        %s208 = smul.u32 128, %s207
        %s209 = smul.u32 %s208, 2
        %s210 = smul.u32 %s209, 2
        %p211 = scmp.lt.s32.totalorder %s21, 1
        %s212 = scalar_select %p211, %s21, 1
        %p213 = scmp.lt.s32.totalorder %s204, 8
        %s214 = scalar_select %p213, %s204, 8
        %s215 = smul.addr %s214, 4
        %s216 = smul.addr %s212, 36
        %s217 = sadd.s32 %s215, %s216
        %s218 = smul.addr %s217, 8
        %s219 = scalar_lea.vmem %s0, %s218
        %p220 = pneg %p52
        %p221 = pneg %p49
        %s222 = sadd.s32 %s22, 1
        %s223 = smul.u32 %s222, 8
        %p224 = scmp.lt.s32.totalorder %s21, 1
        %s225 = scalar_select %p224, %s21, 1
        %p226 = scmp.lt.s32.totalorder %s223, 8
        %s227 = scalar_select %p226, %s223, 8
        %s228 = smul.addr %s227, 4
        %s229 = smul.addr %s225, 36
        %s230 = sadd.s32 %s228, %s229
        %s231 = smul.addr %s230, 8
        %s232 = scalar_lea.vmem %s1, %s231
        %p233 = pneg %p84
        %p234 = pneg %p81
        %p235 = pneg %p105
        %p236 = pneg %p102
        %p237 = pneg %p133
        %p238 = pneg %p130
        %s239 = sand.u32 %s120, 1
        %s240 = scalar_lea.sflag [#allocation3], %s239
        %s241 = sand.u32 %s120, 1
        %s242 = smul.addr %s241, 64
        %s243 = scalar_lea.vmem [#allocation2], %s242
        %s244 = smul.u32 8, %s22
        %s245 = ssub.s32 9, %s244
        %p246 = scmp.lt.s32.totalorder %s245, 8
        %s247 = scalar_select %p246, %s245, 8
        %s248 = smul.u32 128, %s247
        %s249 = smul.u32 %s248, 2
        %s250 = smul.u32 %s249, 2
        %p251 = scmp.lt.s32.totalorder %s21, 1
        %s252 = scalar_select %p251, %s21, 1
        %p253 = scmp.lt.s32.totalorder %s244, 8
        %s254 = scalar_select %p253, %s244, 8
        %s255 = smul.addr %s254, 4
        %s256 = smul.addr %s252, 36
        %s257 = sadd.s32 %s255, %s256
        %s258 = smul.addr %s257, 8
        %s259 = scalar_lea.vmem %s0, %s258
        %s260 = smul.u32 8, %s22
        %s261 = ssub.s32 9, %s260
        %p262 = scmp.lt.s32.totalorder %s261, 8
        %s263 = scalar_select %p262, %s261, 8
        %s264 = smul.u32 128, %s263
        %s265 = smul.u32 %s264, 2
        %s266 = smul.u32 %s265, 2
        %s267 = sadd.s32 %s22, 1
        %s268 = smul.u32 %s267, 8
        %p269 = scmp.lt.s32.totalorder %s21, 1
        %s270 = scalar_select %p269, %s21, 1
        %p271 = scmp.lt.s32.totalorder %s268, 8
        %s272 = scalar_select %p271, %s268, 8
        %s273 = smul.addr %s272, 4
        %s274 = smul.addr %s270, 36
        %s275 = sadd.s32 %s273, %s274
        %s276 = smul.addr %s275, 8
        %s277 = scalar_lea.vmem %s1, %s276
        %s278 = sadd.s32 %s22, 1
        %s279 = smul.u32 %s278, 8
        %s280 = smul.u32 8, %s22
        %v281 = vld [vmem:[%s259] sm:$0xff]
        %v282 = vld [vmem:[%s259 + $0x8] sm:$0x1]
        %v283 = vld [vmem:[%s259 + $0x10] sm:$0xff]
        %v284 = vld [vmem:[%s259 + $0x18] sm:$0x1]
        %v285 = vld [vmem:[%s259 + $0x20] sm:$0xff]
        %v286 = vld [vmem:[%s259 + $0x28] sm:$0x1]
        %v287 = vld [vmem:[%s259 + $0x30] sm:$0xff]
        %v288 = vld [vmem:[%s259 + $0x38] sm:$0x1]
        %v289 = vld [vmem:[%s259 + $0x40] sm:$0xff]
        %v290 = vld [vmem:[%s259 + $0x48] sm:$0x1]
        %v291 = vld [vmem:[%s259 + $0x50] sm:$0xff]
        %v292 = vld [vmem:[%s259 + $0x58] sm:$0x1]
        %v293 = vld [vmem:[%s259 + $0x60] sm:$0xff]
        %v294 = vld [vmem:[%s259 + $0x68] sm:$0x1]
        %v295 = vld [vmem:[%s259 + $0x70] sm:$0xff]
        %v296 = vld [vmem:[%s259 + $0x78] sm:$0x1]
        %v297 = vld [vmem:[%s259 + $0x80] sm:$0xff]
        %v298 = vld [vmem:[%s259 + $0x88] sm:$0x1]
        %v299 = vld [vmem:[%s259 + $0x90] sm:$0xff]
        %v300 = vld [vmem:[%s259 + $0x98] sm:$0x1]
        %v301 = vld [vmem:[%s259 + $0xa0] sm:$0xff]
        %v302 = vld [vmem:[%s259 + $0xa8] sm:$0x1]
        %v303 = vld [vmem:[%s259 + $0xb0] sm:$0xff]
        %v304 = vld [vmem:[%s259 + $0xb8] sm:$0x1]
        %v305 = vld [vmem:[%s259 + $0xc0] sm:$0xff]
        %v306 = vld [vmem:[%s259 + $0xc8] sm:$0x1]
        %v307 = vld [vmem:[%s259 + $0xd0] sm:$0xff]
        %v308 = vld [vmem:[%s259 + $0xd8] sm:$0x1]
        %v309 = vld [vmem:[%s259 + $0xe0] sm:$0xff]
        %v310 = vld [vmem:[%s259 + $0xe8] sm:$0x1]
        %v311 = vld [vmem:[%s259 + $0xf0] sm:$0xff]
        %v312 = vld [vmem:[%s259 + $0xf8] sm:$0x1]
        %v313 = vld [vmem:[%s277] sm:$0xff]
        %v314 = vld [vmem:[%s277 + $0x8] sm:$0x1]
        %v315 = vld [vmem:[%s277 + $0x10] sm:$0xff]
        %v316 = vld [vmem:[%s277 + $0x18] sm:$0x1]
        %vm333 = vcmask 1046528
        %v334 = vrot.slane %v281, 1
        %v335 = vrot.slane %v282, 1
        %v336 = vsel %vm333, %v334, %v335
        %v337 = vrot.slane %v285, 1
        %v338 = vrot.slane %v286, 1
        %v339 = vsel %vm333, %v337, %v338
        %v340 = vrot.slane %v289, 1
        %v341 = vrot.slane %v290, 1
        %v342 = vsel %vm333, %v340, %v341
        %v343 = vrot.slane %v293, 1
        %v344 = vrot.slane %v294, 1
        %v345 = vsel %vm333, %v343, %v344
        %v346 = vrot.slane %v297, 1
        %v347 = vrot.slane %v298, 1
        %v348 = vsel %vm333, %v346, %v347
        %v349 = vrot.slane %v301, 1
        %v350 = vrot.slane %v302, 1
        %v351 = vsel %vm333, %v349, %v350
        %v352 = vrot.slane %v305, 1
        %v353 = vrot.slane %v306, 1
        %v354 = vsel %vm333, %v352, %v353
        %v355 = vrot.slane %v309, 1
        %v356 = vrot.slane %v310, 1
        %v357 = vsel %vm333, %v355, %v356
        %358 = vrot.lane.b32.xlu0 %v336, 16
        %v359 = vpop.permute.xlu0 %358
        %360 = vrot.lane.b32.xlu0 %v339, 16
        %v361 = vpop.permute.xlu0 %360
        %362 = vrot.lane.b32.xlu0 %v342, 16
        %v363 = vpop.permute.xlu0 %362
        %364 = vrot.lane.b32.xlu0 %v345, 16
        %v365 = vpop.permute.xlu0 %364
        %366 = vrot.lane.b32.xlu0 %v348, 16
        %v367 = vpop.permute.xlu0 %366
        %368 = vrot.lane.b32.xlu0 %v351, 16
        %v369 = vpop.permute.xlu0 %368
        %370 = vrot.lane.b32.xlu0 %v354, 16
        %v371 = vpop.permute.xlu0 %370
        %372 = vrot.lane.b32.xlu0 %v357, 16
        %v373 = vpop.permute.xlu0 %372
        %390 = vrot.lane.b32.xlu0 %v283, 32
        %v391 = vpop.permute.xlu0 %390
        %392 = vrot.lane.b32.xlu0 %v287, 32
        %v393 = vpop.permute.xlu0 %392
        %394 = vrot.lane.b32.xlu0 %v291, 32
        %v395 = vpop.permute.xlu0 %394
        %396 = vrot.lane.b32.xlu0 %v295, 32
        %v397 = vpop.permute.xlu0 %396
        %398 = vrot.lane.b32.xlu0 %v299, 32
        %v399 = vpop.permute.xlu0 %398
        %400 = vrot.lane.b32.xlu0 %v303, 32
        %v401 = vpop.permute.xlu0 %400
        %402 = vrot.lane.b32.xlu0 %v307, 32
        %v403 = vpop.permute.xlu0 %402
        %404 = vrot.lane.b32.xlu0 %v311, 32
        %v405 = vpop.permute.xlu0 %404
        %v422 = vrot.slane %v283, 1
        %v423 = vrot.slane %v284, 1
        %v424 = vsel %vm333, %v422, %v423
        %v425 = vrot.slane %v287, 1
        %v426 = vrot.slane %v288, 1
        %v427 = vsel %vm333, %v425, %v426
        %v428 = vrot.slane %v291, 1
        %v429 = vrot.slane %v292, 1
        %v430 = vsel %vm333, %v428, %v429
        %v431 = vrot.slane %v295, 1
        %v432 = vrot.slane %v296, 1
        %v433 = vsel %vm333, %v431, %v432
        %v434 = vrot.slane %v299, 1
        %v435 = vrot.slane %v300, 1
        %v436 = vsel %vm333, %v434, %v435
        %v437 = vrot.slane %v303, 1
        %v438 = vrot.slane %v304, 1
        %v439 = vsel %vm333, %v437, %v438
        %v440 = vrot.slane %v307, 1
        %v441 = vrot.slane %v308, 1
        %v442 = vsel %vm333, %v440, %v441
        %v443 = vrot.slane %v311, 1
        %v444 = vrot.slane %v312, 1
        %v445 = vsel %vm333, %v443, %v444
        %446 = vrot.lane.b32.xlu0 %v424, 48
        %v447 = vpop.permute.xlu0 %446
        %448 = vrot.lane.b32.xlu0 %v427, 48
        %v449 = vpop.permute.xlu0 %448
        %450 = vrot.lane.b32.xlu0 %v430, 48
        %v451 = vpop.permute.xlu0 %450
        %452 = vrot.lane.b32.xlu0 %v433, 48
        %v453 = vpop.permute.xlu0 %452
        %454 = vrot.lane.b32.xlu0 %v436, 48
        %v455 = vpop.permute.xlu0 %454
        %456 = vrot.lane.b32.xlu0 %v439, 48
        %v457 = vpop.permute.xlu0 %456
        %458 = vrot.lane.b32.xlu0 %v442, 48
        %v459 = vpop.permute.xlu0 %458
        %460 = vrot.lane.b32.xlu0 %v445, 48
        %v461 = vpop.permute.xlu0 %460
        %471 = vrot.lane.b32.xlu0 %v285, 64
        %v472 = vpop.permute.xlu0 %471
        %473 = vrot.lane.b32.xlu0 %v289, 64
        %v474 = vpop.permute.xlu0 %473
        %475 = vrot.lane.b32.xlu0 %v293, 64
        %v476 = vpop.permute.xlu0 %475
        %477 = vrot.lane.b32.xlu0 %v297, 64
        %v478 = vpop.permute.xlu0 %477
        %479 = vrot.lane.b32.xlu0 %v301, 64
        %v480 = vpop.permute.xlu0 %479
        %481 = vrot.lane.b32.xlu0 %v305, 64
        %v482 = vpop.permute.xlu0 %481
        %483 = vrot.lane.b32.xlu0 %v309, 64
        %v484 = vpop.permute.xlu0 %483
        %485 = vrot.lane.b32.xlu0 %v313, 64
        %v486 = vpop.permute.xlu0 %485
        %v496 = vrot.slane %v313, 1
        %v497 = vrot.slane %v314, 1
        %v498 = vsel %vm333, %v496, %v497
        %499 = vrot.lane.b32.xlu0 %v339, 80
        %v500 = vpop.permute.xlu0 %499
        %501 = vrot.lane.b32.xlu0 %v342, 80
        %v502 = vpop.permute.xlu0 %501
        %503 = vrot.lane.b32.xlu0 %v345, 80
        %v504 = vpop.permute.xlu0 %503
        %505 = vrot.lane.b32.xlu0 %v348, 80
        %v506 = vpop.permute.xlu0 %505
        %507 = vrot.lane.b32.xlu0 %v351, 80
        %v508 = vpop.permute.xlu0 %507
        %509 = vrot.lane.b32.xlu0 %v354, 80
        %v510 = vpop.permute.xlu0 %509
        %511 = vrot.lane.b32.xlu0 %v357, 80
        %v512 = vpop.permute.xlu0 %511
        %513 = vrot.lane.b32.xlu0 %v498, 80
        %v514 = vpop.permute.xlu0 %513
        %524 = vrot.lane.b32.xlu0 %v287, 96
        %v525 = vpop.permute.xlu0 %524
        %526 = vrot.lane.b32.xlu0 %v291, 96
        %v527 = vpop.permute.xlu0 %526
        %528 = vrot.lane.b32.xlu0 %v295, 96
        %v529 = vpop.permute.xlu0 %528
        %530 = vrot.lane.b32.xlu0 %v299, 96
        %v531 = vpop.permute.xlu0 %530
        %532 = vrot.lane.b32.xlu0 %v303, 96
        %v533 = vpop.permute.xlu0 %532
        %534 = vrot.lane.b32.xlu0 %v307, 96
        %v535 = vpop.permute.xlu0 %534
        %536 = vrot.lane.b32.xlu0 %v311, 96
        %v537 = vpop.permute.xlu0 %536
        %538 = vrot.lane.b32.xlu0 %v315, 96
        %v539 = vpop.permute.xlu0 %538
        %v549 = vrot.slane %v315, 1
        %v550 = vrot.slane %v316, 1
        %v551 = vsel %vm333, %v549, %v550
        %552 = vrot.lane.b32.xlu0 %v427, 112
        %v553 = vpop.permute.xlu0 %552
        %554 = vrot.lane.b32.xlu0 %v430, 112
        %v555 = vpop.permute.xlu0 %554
        %556 = vrot.lane.b32.xlu0 %v433, 112
        %v557 = vpop.permute.xlu0 %556
        %558 = vrot.lane.b32.xlu0 %v436, 112
        %v559 = vpop.permute.xlu0 %558
        %560 = vrot.lane.b32.xlu0 %v439, 112
        %v561 = vpop.permute.xlu0 %560
        %562 = vrot.lane.b32.xlu0 %v442, 112
        %v563 = vpop.permute.xlu0 %562
        %564 = vrot.lane.b32.xlu0 %v445, 112
        %v565 = vpop.permute.xlu0 %564
        %566 = vrot.lane.b32.xlu0 %v551, 112
        %v567 = vpop.permute.xlu0 %566
        %vm576 = vcmask 130048
        %v577 = vsel %vm576, %v281, %v359
        %v578 = vsel %vm576, %v285, %v361
        %v579 = vsel %vm576, %v289, %v363
        %v580 = vsel %vm576, %v293, %v365
        %v581 = vsel %vm576, %v297, %v367
        %v582 = vsel %vm576, %v301, %v369
        %v583 = vsel %vm576, %v305, %v371
        %v584 = vsel %vm576, %v309, %v373
        %vm585 = vcmask 261120
        %v586 = vsel %vm585, %v577, %v391
        %v587 = vsel %vm585, %v578, %v393
        %v588 = vsel %vm585, %v579, %v395
        %v589 = vsel %vm585, %v580, %v397
        %v590 = vsel %vm585, %v581, %v399
        %v591 = vsel %vm585, %v582, %v401
        %v592 = vsel %vm585, %v583, %v403
        %v593 = vsel %vm585, %v584, %v405
        %vm594 = vcmask 392192
        %v595 = vsel %vm594, %v586, %v447
        %v596 = vsel %vm594, %v587, %v449
        %v597 = vsel %vm594, %v588, %v451
        %v598 = vsel %vm594, %v589, %v453
        %v599 = vsel %vm594, %v590, %v455
        %v600 = vsel %vm594, %v591, %v457
        %v601 = vsel %vm594, %v592, %v459
        %v602 = vsel %vm594, %v593, %v461
        %vm603 = vcmask 523264
        %v604 = vsel %vm603, %v595, %v472
        %v605 = vsel %vm603, %v596, %v474
        %v606 = vsel %vm603, %v597, %v476
        %v607 = vsel %vm603, %v598, %v478
        %v608 = vsel %vm603, %v599, %v480
        %v609 = vsel %vm603, %v600, %v482
        %v610 = vsel %vm603, %v601, %v484
        %v611 = vsel %vm603, %v602, %v486
        %vm612 = vcmask 654336
        %v613 = vsel %vm612, %v604, %v500
        %v614 = vsel %vm612, %v605, %v502
        %v615 = vsel %vm612, %v606, %v504
        %v616 = vsel %vm612, %v607, %v506
        %v617 = vsel %vm612, %v608, %v508
        %v618 = vsel %vm612, %v609, %v510
        %v619 = vsel %vm612, %v610, %v512
        %v620 = vsel %vm612, %v611, %v514
        %vm621 = vcmask 785408
        %v622 = vsel %vm621, %v613, %v525
        %v623 = vsel %vm621, %v614, %v527
        %v624 = vsel %vm621, %v615, %v529
        %v625 = vsel %vm621, %v616, %v531
        %v626 = vsel %vm621, %v617, %v533
        %v627 = vsel %vm621, %v618, %v535
        %v628 = vsel %vm621, %v619, %v537
        %v629 = vsel %vm621, %v620, %v539
        %vm630 = vcmask 916480
        %v631 = vsel %vm630, %v622, %v553
        %v632 = vsel %vm630, %v623, %v555
        %v633 = vsel %vm630, %v624, %v557
        %v634 = vsel %vm630, %v625, %v559
        %v635 = vsel %vm630, %v626, %v561
        %v636 = vsel %vm630, %v627, %v563
        %v637 = vsel %vm630, %v628, %v565
        %v638 = vsel %vm630, %v629, %v567
        %v639 = vld [vmem:[%s2] sm:$0xff]
        %v640 = vld [vmem:[%s2 + $0x8] sm:$0xff]
        %v641 = vld [vmem:[%s2 + $0x10] sm:$0xff]
        %v642 = vld [vmem:[%s2 + $0x18] sm:$0xff]
        %v643 = vld [vmem:[%s2 + $0x20] sm:$0xff]
        %v644 = vld [vmem:[%s2 + $0x28] sm:$0xff]
        %v645 = vld [vmem:[%s2 + $0x30] sm:$0xff]
        %v646 = vld [vmem:[%s2 + $0x38] sm:$0xff]
        %v647 = vld [vmem:[%s2 + $0x40] sm:$0xff]
        %v648 = vld [vmem:[%s2 + $0x48] sm:$0xff]
        %v649 = vld [vmem:[%s2 + $0x50] sm:$0xff]
        %v650 = vld [vmem:[%s2 + $0x58] sm:$0xff]
        %v651 = vld [vmem:[%s2 + $0x60] sm:$0xff]
        %v652 = vld [vmem:[%s2 + $0x68] sm:$0xff]
        %v653 = vld [vmem:[%s2 + $0x70] sm:$0xff]
        %v654 = vld [vmem:[%s2 + $0x78] sm:$0xff]
        %655 = vmatprep.subr.mxu0 0.0
        %656 = vmatpush1.msra.mxu0 %v639
        %657 = vmatprep.subr.mxu0 0.0
        %658 = vmatpush1.msra.mxu0 %v640
        %659 = vmatprep.subr.mxu0 0.0
        %660 = vmatpush1.msra.mxu0 %v641
        %661 = vmatprep.subr.mxu0 0.0
        %662 = vmatpush1.msra.mxu0 %v642
        %663 = vmatprep.subr.mxu0 0.0
        %664 = vmatpush1.msra.mxu0 %v643
        %665 = vmatprep.subr.mxu0 0.0
        %666 = vmatpush1.msra.mxu0 %v644
        %667 = vmatprep.subr.mxu0 0.0
        %668 = vmatpush1.msra.mxu0 %v645
        %669 = vmatprep.subr.mxu0 0.0
        %670 = vmatpush1.msra.mxu0 %v646
        %671 = vmatprep.subr.mxu0 0.0
        %672 = vmatpush1.msra.mxu0 %v647
        %673 = vmatprep.subr.mxu0 0.0
        %674 = vmatpush1.msra.mxu0 %v648
        %675 = vmatprep.subr.mxu0 0.0
        %676 = vmatpush1.msra.mxu0 %v649
        %677 = vmatprep.subr.mxu0 0.0
        %678 = vmatpush1.msra.mxu0 %v650
        %679 = vmatprep.subr.mxu0 0.0
        %680 = vmatpush1.msra.mxu0 %v651
        %681 = vmatprep.subr.mxu0 0.0
        %682 = vmatpush1.msra.mxu0 %v652
        %683 = vmatprep.subr.mxu0 0.0
        %684 = vmatpush1.msra.mxu0 %v653
        %685 = vmatprep.subr.mxu0 0.0
        %686 = vmatpush1.msra.mxu0 %v654
        %687 = vmatprep.subr.mxu0 0.0
        %688 = vmatpush1.msra.mxu0 0.0
        %689 = vmatprep.subr.mxu0 0.0
        %690 = vmatpush1.msra.mxu0 0.0
        %691 = vmatprep.subr.mxu0 0.0
        %692 = vmatpush1.msra.mxu0 0.0
        %693 = vmatprep.subr.mxu0 0.0
        %694 = vmatpush1.msra.mxu0 0.0
        %695 = vmatprep.subr.mxu0 0.0
        %696 = vmatpush1.msra.mxu0 0.0
        %697 = vmatprep.subr.mxu0 0.0
        %698 = vmatpush1.msra.mxu0 0.0
        %699 = vmatprep.subr.mxu0 0.0
        %700 = vmatpush1.msra.mxu0 0.0
        %701 = vmatprep.subr.mxu0 0.0
        %702 = vmatpush1.msra.mxu0 0.0
        %703 = vmatprep.subr.mxu0 0.0
        %704 = vmatpush1.msra.mxu0 0.0
        %705 = vmatprep.subr.mxu0 0.0
        %706 = vmatpush1.msra.mxu0 0.0
        %707 = vmatprep.subr.mxu0 0.0
        %708 = vmatpush1.msra.mxu0 0.0
        %709 = vmatprep.subr.mxu0 0.0
        %710 = vmatpush1.msra.mxu0 0.0
        %711 = vmatprep.subr.mxu0 0.0
        %712 = vmatpush1.msra.mxu0 0.0
        %713 = vmatprep.subr.mxu0 0.0
        %714 = vmatpush1.msra.mxu0 0.0
        %715 = vmatprep.subr.mxu0 0.0
        %716 = vmatpush1.msra.mxu0 0.0
        %717 = vmatprep.subr.mxu0 0.0
        %718 = vmatpush1.msra.mxu0 0.0
        %719 = vmatprep.mubr.f32.mxu0 0.0
        %720 = vmatmul.mubr.f32.gmra.mrb[0].mxu0 %v631
        %v721 = vpop.f32.mrb[0].mxu0
        %v722 = vadd.f32 0.0, %v721
        %v723 = vpop.f32.mrb[0].mxu0
        %724 = vmatprep.mubr.f32.mxu0 0.0
        %725 = vmatmul.mubr.f32.gmra.mrb[0].mxu0 %v632
        %v726 = vpop.f32.mrb[0].mxu0
        %v727 = vadd.f32 0.0, %v726
        %v728 = vpop.f32.mrb[0].mxu0
        %729 = vmatprep.mubr.f32.mxu0 0.0
        %730 = vmatmul.mubr.f32.gmra.mrb[0].mxu0 %v633
        %v731 = vpop.f32.mrb[0].mxu0
        %v732 = vadd.f32 0.0, %v731
        %v733 = vpop.f32.mrb[0].mxu0
        %734 = vmatprep.mubr.f32.mxu0 0.0
        %735 = vmatmul.mubr.f32.gmra.mrb[0].mxu0 %v634
        %v736 = vpop.f32.mrb[0].mxu0
        %v737 = vadd.f32 0.0, %v736
        %v738 = vpop.f32.mrb[0].mxu0
        %739 = vmatprep.mubr.f32.mxu0 0.0
        %740 = vmatmul.mubr.f32.gmra.mrb[0].mxu0 %v635
        %v741 = vpop.f32.mrb[0].mxu0
        %v742 = vadd.f32 0.0, %v741
        %v743 = vpop.f32.mrb[0].mxu0
        %744 = vmatprep.mubr.f32.mxu0 0.0
        %745 = vmatmul.mubr.f32.gmra.mrb[0].mxu0 %v636
        %v746 = vpop.f32.mrb[0].mxu0
        %v747 = vadd.f32 0.0, %v746
        %v748 = vpop.f32.mrb[0].mxu0
        %749 = vmatprep.mubr.f32.mxu0 0.0
        %750 = vmatmul.mubr.f32.gmra.mrb[0].mxu0 %v637
        %v751 = vpop.f32.mrb[0].mxu0
        %v752 = vadd.f32 0.0, %v751
        %v753 = vpop.f32.mrb[0].mxu0
        %754 = vmatprep.mubr.f32.mxu0 0.0
        %755 = vmatmul.mubr.f32.gmra.mrb[0].mxu0 %v638
        %v756 = vpop.f32.mrb[0].mxu0
        %v757 = vadd.f32 0.0, %v756
        %v758 = vpop.f32.mrb[0].mxu0
        %759 = vdwg.mxu0
        %760 = vst.msk [vmem:[%s243] sm:$0xff] %vm576, %v722
        %761 = vst.msk [vmem:[%s243 + $0x8] sm:$0xff] %vm576, %v727
        %762 = vst.msk [vmem:[%s243 + $0x10] sm:$0xff] %vm576, %v732
        %763 = vst.msk [vmem:[%s243 + $0x18] sm:$0xff] %vm576, %v737
        %764 = vst.msk [vmem:[%s243 + $0x20] sm:$0xff] %vm576, %v742
        %765 = vst.msk [vmem:[%s243 + $0x28] sm:$0xff] %vm576, %v747
        %766 = vst.msk [vmem:[%s243 + $0x30] sm:$0xff] %vm576, %v752
        %767 = vst.msk [vmem:[%s243 + $0x38] sm:$0xff] %vm576, %v757
        %s768 = sand.u32 %s120, 1
        %s769 = scalar_lea.sflag [#allocation3], %s768
        %s770 = sand.u32 %s120, 1
        %s771 = smul.addr %s770, 64
        %s772 = scalar_lea.vmem [#allocation2], %s771
        // Predicated region
        $region33: #{tpu_custom_call.1} parent=31 // pred_check
          %p773 = pneg %p130
        $region34: #{tpu_custom_call.1} parent=31 // pred_check_branch
          %775 = sbr.rel (%p773) target = $region36
        $region35: #{tpu_custom_call.1} parent=31 // pred_region
          %s776 = smul.u32 8, %s22
          %s778 = ssub.s32 1024, 1024
          %779 = vsyncadd %s769, %s778
          %s780 = smul.addr %s21, 8
          %s781 = sadd.s32 %s776, %s780
          %s782 = smul.addr %s781, 128
          %s783 = scalar_lea.hbm %s3, %s782
          %s784 = sshll.u32 %s772, 4
          %s785 = int_to_ptr.vmem [resolvable:$true] %s784
          %790 = dma.vmem_to_hbm [thread:$0]  %s785, 1024, %s783, %s769, 128, 128, 8
        $region36: #{tpu_custom_call.1} parent=31 // pred_fallthru
          _
      $region32: #{tpu_custom_call.1} parent=5 // pred_fallthru
        _
      %p791 = scmp.le.s32.totalorder 2, %s12
      // Predicated region
      $region37: #{tpu_custom_call.1} parent=5 // pred_check
        %p792 = pneg %p791
      $region38: #{tpu_custom_call.1} parent=5 // pred_check_branch
        %794 = sbr.rel (%p792) target = $region40
      $region39: #{tpu_custom_call.1} parent=5 // pred_region
        %s795 = ssub.s32 %s12, 2
        // Predicated region
        $region41: #{tpu_custom_call.1} parent=39 // pred_check
          %p796 = pneg %p136
        $region42: #{tpu_custom_call.1} parent=39 // pred_check_branch
          %798 = sbr.rel (%p796) target = $region44
        $region43: #{tpu_custom_call.1} parent=39 // pred_region
          %s799 = sand.u32 %s121, 1
          %s800 = scalar_lea.sflag [#allocation3], %s799
          %s801 = sand.u32 %s121, 1
          %s802 = smul.addr %s801, 64
          %s803 = scalar_lea.vmem [#allocation2], %s802
          %804 = dma.done %s800, 1024
        $region44: #{tpu_custom_call.1} parent=39 // pred_fallthru
          _
      $region40: #{tpu_custom_call.1} parent=5 // pred_fallthru
        _
    $region6: #{tpu_custom_call.1} parent=1 // loop_footer
      %s16 = sadd.s32 1, %s12
    $region7: #{tpu_custom_call.1} parent=1 // loop_footer_branch
      %11 = sbr.rel target = $region3
    $region8: #{tpu_custom_call.1} parent=1 // loop_exit
      _
    %805 = vsyncpa [#allocation3], 1
    %s806 = scalar_lea.sflag [#allocation3], 1
    %807 = vsyncpa %s806, 1

</llo_original>
